<compile_context>
chip_gen: v6e
topology: v6e:2x2x1
jax: 0.10.0
libtpu: 0.0.40
codegen_flags: <defaults>
</compile_context>

<pallas_src>
import functools

import jax
import jax.numpy as jnp
from jax.experimental import pallas as pl
from jax.experimental.pallas import tpu as pltpu


def _fused_embed_kernel(idx_ref, table_ref, out_ref):
    """out[n, :] = concat_f table_f[idx[n, f], :] via one block-diagonal matmul."""
    tile_n, n_feat = idx_ref.shape
    sum_v = table_ref.shape[0]

    idx = idx_ref[...]                                          # (TILE_N, F) int32
    col = jax.lax.broadcasted_iota(jnp.int32, (tile_n, sum_v), 1)

    # Multi-hot: exactly one 1 per feature per row.  Features map to disjoint
    # row/col blocks of the block-diagonal table, so summing them is exact.
    multi_hot = jnp.zeros((tile_n, sum_v), jnp.float32)
    for f in range(n_feat):                                     # F is small & static
        multi_hot = multi_hot + (col == idx[:, f:f + 1]).astype(jnp.float32)

    out_ref[...] = jnp.dot(
        multi_hot, table_ref[...], preferred_element_type=jnp.float32
    ).astype(out_ref.dtype)


@functools.partial(jax.jit, static_argnames=("tile_n",))
def fixed_feat_embedding_fwd(fixed_tensor, v_offsets, fused_table, *, tile_n=512):
    """fixed_tensor: (N, F) int, v_offsets: (F,) int32 row offsets,
    fused_table: (sumV, sumD) f32  ->  (N, sumD) f32."""
    n, n_feat = fixed_tensor.shape
    sum_v, sum_d = fused_table.shape

    # Shift each feature's indices into its block-diagonal row range (one tiny
    # XLA add on (N, F) — avoids F strided column slices outside the kernel).
    shifted_idx = fixed_tensor.astype(jnp.int32) + v_offsets[None, :].astype(jnp.int32)

    # Full-dim block when N is small (always layout-legal); otherwise a
    # multiple-of-8 row tile.  A partial last block is masked by Pallas.
    tile = n if n <= tile_n else tile_n
    grid = (pl.cdiv(n, tile),)

    return pl.pallas_call(
        _fused_embed_kernel,
        out_shape=jax.ShapeDtypeStruct((n, sum_d), fused_table.dtype),
        grid=grid,
        in_specs=[
            pl.BlockSpec((tile, n_feat), lambda i: (i, 0)),
            pl.BlockSpec((sum_v, sum_d), lambda i: (0, 0)),     # VMEM-resident table
        ],
        out_specs=pl.BlockSpec((tile, sum_d), lambda i: (i, 0)),
        compiler_params=pltpu.CompilerParams(
            dimension_semantics=("parallel",)),                 # v7x: shard rows on 2 TCs
    )(shifted_idx, fused_table)


class FixedFeatEmbedding:
    """JAX/Pallas port of the PyTorch FixedFeatEmbedding module (fully fused)."""

    def __init__(self, fixed_emb_para_l, key):
        self.vocab_sizes = [int(v) for (_name, v, _d) in fixed_emb_para_l]
        self.emb_dims = [int(d) for (_name, _v, d) in fixed_emb_para_l]

        # nn.Embedding default init is N(0, 1); replicate deterministically.
        self.tables = []
        for v, d in zip(self.vocab_sizes, self.emb_dims):
            key, sub = jax.random.split(key)
            self.tables.append(jax.random.normal(sub, (v, d), jnp.float32))

        # Block-diagonal fused table (sumV, sumD).
        sum_d = sum(self.emb_dims)
        rows, d_off = [], 0
        for t, d in zip(self.tables, self.emb_dims):
            block = jnp.zeros((t.shape[0], sum_d), jnp.float32)
            rows.append(block.at[:, d_off:d_off + d].set(t))
            d_off += d
        self.fused_table = jnp.concatenate(rows, axis=0)        # (sumV, sumD)

        # Cumulative-V row offsets per feature.
        v_off, acc = [], 0
        for v in self.vocab_sizes:
            v_off.append(acc)
            acc += v
        self.v_offsets = jnp.asarray(v_off, jnp.int32)          # (F,)

    def __call__(self, fixed_tensor):
        # fixed_tensor: (N, F) int  ->  (N, sum D) f32, features concatenated.
        return fixed_feat_embedding_fwd(fixed_tensor, self.v_offsets, self.fused_table)


if __name__ == "__main__":
    key = jax.random.PRNGKey(0)

    # (name, nr_unique, nr_emb_dim) per categorical feature.
    fixed_emb_para_l = [("feat_a", 11, 8), ("feat_b", 7, 16), ("feat_c", 5, 8)]
    key, k_mod = jax.random.split(key)
    module = FixedFeatEmbedding(fixed_emb_para_l, k_mod)

    # N = encode_len * batch = 8 * 2 = 16 rows, F = 3 categorical features.
    n_rows = 16
    cols = []
    for (_name, v, _d) in fixed_emb_para_l:
        key, sub = jax.random.split(key)
        cols.append(jax.random.randint(sub, (n_rows,), 0, v, dtype=jnp.int32))
    fixed_tensor = jnp.stack(cols, axis=1)                      # (16, 3) int32

    out = jax.block_until_ready(module(fixed_tensor))

    # Pure-JAX reference: per-feature row gather + concat.
    ref = jnp.concatenate(
        [jnp.take(t, fixed_tensor[:, i], axis=0)
         for i, t in enumerate(module.tables)],
        axis=1,
    )
    assert out.shape == (n_rows, sum(d for _, _, d in fixed_emb_para_l)), out.shape
    assert jnp.allclose(out, ref, atol=1e-5), "mismatch vs reference"

    print("KERNEL_OK")
</pallas_src>

<mosaic_0001>
module attributes {stable_mosaic.version = 11 : i64} {
  func.func @_fused_embed_kernel(%arg0: i32, %arg1: memref<16x3xi32, #tpu.memory_space<vmem>>, %arg2: memref<23x32xf32, #tpu.memory_space<vmem>>, %arg3: memref<16x32xf32, #tpu.memory_space<vmem>>) attributes {dimension_semantics = [#tpu.dimension_semantics<parallel>], iteration_bounds = array<i64: 1>, scalar_prefetch = 0 : i64, scratch_operands = 0 : i64, tpu.core_type = #tpu.core_type<tc>, window_params = [{transform_indices = @transform_0, window_bounds = array<i64: 16, 3>}, {pipeline_mode = #tpu.pipeline_mode<synchronous>, transform_indices = @transform_1, window_bounds = array<i64: 23, 32>}, {transform_indices = @transform_2, window_bounds = array<i64: 16, 32>}]} {
    %c0 = arith.constant 0 : index
    %c0_0 = arith.constant 0 : index
    %0 = vector.load %arg1[%c0, %c0_0] : memref<16x3xi32, #tpu.memory_space<vmem>>, vector<16x3xi32>
    %1 = tpu.iota {dimensions = array<i32: 1>} : vector<16x23xi32>
    %cst = arith.constant 0.000000e+00 : f32
    %2 = vector.broadcast %cst : f32 to vector<16x23xf32>
    %3 = vector.extract_strided_slice %0 {offsets = [0, 0], sizes = [16, 1], strides = [1, 1]} : vector<16x3xi32> to vector<16x1xi32>
    %4 = vector.broadcast %3 : vector<16x1xi32> to vector<16x23xi32>
    %5 = arith.cmpi eq, %1, %4 : vector<16x23xi32>
    %6 = arith.extui %5 : vector<16x23xi1> to vector<16x23xi32>
    %7 = arith.sitofp %6 : vector<16x23xi32> to vector<16x23xf32>
    %8 = arith.addf %2, %7 : vector<16x23xf32>
    %9 = vector.extract_strided_slice %0 {offsets = [0, 1], sizes = [16, 1], strides = [1, 1]} : vector<16x3xi32> to vector<16x1xi32>
    %10 = vector.broadcast %9 : vector<16x1xi32> to vector<16x23xi32>
    %11 = arith.cmpi eq, %1, %10 : vector<16x23xi32>
    %12 = arith.extui %11 : vector<16x23xi1> to vector<16x23xi32>
    %13 = arith.sitofp %12 : vector<16x23xi32> to vector<16x23xf32>
    %14 = arith.addf %8, %13 : vector<16x23xf32>
    %15 = vector.extract_strided_slice %0 {offsets = [0, 2], sizes = [16, 1], strides = [1, 1]} : vector<16x3xi32> to vector<16x1xi32>
    %16 = vector.broadcast %15 : vector<16x1xi32> to vector<16x23xi32>
    %17 = arith.cmpi eq, %1, %16 : vector<16x23xi32>
    %18 = arith.extui %17 : vector<16x23xi1> to vector<16x23xi32>
    %19 = arith.sitofp %18 : vector<16x23xi32> to vector<16x23xf32>
    %20 = arith.addf %14, %19 : vector<16x23xf32>
    %c0_1 = arith.constant 0 : index
    %c0_2 = arith.constant 0 : index
    %21 = vector.load %arg2[%c0_1, %c0_2] : memref<23x32xf32, #tpu.memory_space<vmem>>, vector<23x32xf32>
    %cst_3 = arith.constant dense<0.000000e+00> : vector<16x32xf32>
    %22 = tpu.matmul %20, %21, %cst_3 {dimension_numbers = #tpu.dot_dimension_numbers<[1], [0], [0], [1], [0, 0, 1, 1], [], []>} : vector<16x23xf32>, vector<23x32xf32>, vector<16x32xf32> -> vector<16x32xf32>
    %c0_4 = arith.constant 0 : index
    %c0_5 = arith.constant 0 : index
    %23 = vector.load %arg3[%c0_4, %c0_5] : memref<16x32xf32, #tpu.memory_space<vmem>>, vector<16x32xf32>
    tpu.vector_store %arg3[%c0_4, %c0_5], %22 {strides = array<i32>} : memref<16x32xf32, #tpu.memory_space<vmem>>, vector<16x32xf32>,
    return
  }
  func.func @transform_0(%arg0: i32) -> (i32, i32) {
    %c0_i32 = arith.constant 0 : i32
    %c0_i32_0 = arith.constant 0 : i32
    return %arg0, %c0_i32 : i32, i32
  }
  func.func @transform_1(%arg0: i32) -> (i32, i32) {
    %c0_i32 = arith.constant 0 : i32
    %c0_i32_0 = arith.constant 0 : i32
    %c0_i32_1 = arith.constant 0 : i32
    return %c0_i32, %c0_i32_0 : i32, i32
  }
  func.func @transform_2(%arg0: i32) -> (i32, i32) {
    %c0_i32 = arith.constant 0 : i32
    %c0_i32_0 = arith.constant 0 : i32
    return %arg0, %c0_i32 : i32, i32
  }
}

</mosaic_0001>

<llo_original>
// kernel: fixed_feat_embedding_fwd.1
$region0: #{fixed_feat_embedding_fwd.1}
  #allocation0 [shape = 'u32[]', space=smem, size = 0x4, offset = 0x4, fixed_abs, tag = 'smem constant byte address 0x4 - core index']
  #allocation1 [shape = 'u32[144,128]{1,0:T(1,128)}', space=vmem, size = 0x12000, scoped, tag = 'internal scratch']
  %s0 = inlined_call_operand.vmem [shape: s32[16,3], index: 0, kind: input, shape index: {}]
  %s1 = inlined_call_operand.vmem [shape: f32[23,32], index: 1, kind: input, shape index: {}]
  %s2 = inlined_call_operand.hbm [shape: f32[16,32], index: 2, kind: output, shape index: {}]
  %s3 = sld [smem:[#allocation0]]
  $region18: #{fixed_feat_embedding_fwd.1} parent=0
    _
  %s5 = ssub.s32 1, %s3
  %s6 = scalar_select 0, %s5, %s3
  $region1: #{fixed_feat_embedding_fwd.1} parent=0
    #allocation2 [shape = 'u8[8192]{0}', space=vmem, size = 0x2000, scoped, tag = 'output window, operand 0, single buffered']
    #allocation3 [shape = 's32[1]{0}', space=sflag, size = 0x4, scoped, tag = 'scoped memory for fixed_feat_embedding_fwd.1']
    %7 = vsyncpa [#allocation3], 0
    // Predicated region
    $region2: #{fixed_feat_embedding_fwd.1} parent=1 // pred_check
      _
    $region3: #{fixed_feat_embedding_fwd.1} parent=1 // pred_check_branch
      %9 = sbr.rel (0) target = $region5
    $region4: #{fixed_feat_embedding_fwd.1} parent=1 // pred_region
      _
    $region5: #{fixed_feat_embedding_fwd.1} parent=1 // pred_fallthru
      _
    // Predicated region
    $region6: #{fixed_feat_embedding_fwd.1} parent=1 // pred_check
      _
    $region7: #{fixed_feat_embedding_fwd.1} parent=1 // pred_check_branch
      %11 = sbr.rel (0) target = $region9
    $region8: #{fixed_feat_embedding_fwd.1} parent=1 // pred_region
      _
    $region9: #{fixed_feat_embedding_fwd.1} parent=1 // pred_fallthru
      _
    %v12 = vld [vmem:[%s0] sm:$0xff]
    %v13 = vld [vmem:[%s0 + $0x8] sm:$0xff]
    %v14 = vlaneseq
    %v15 = vand.u32 %v14, 127
    %16 = vset.pattern.permute.xlu0 0
    %17 = vperm.xlu0 %16, %v12
    %v18 = vpop.permute.xlu0 %17
    %19 = vset.pattern.permute.xlu0 0
    %20 = vperm.xlu0 %19, %v13
    %v21 = vpop.permute.xlu0 %20
    %vm22 = vcmp.eq.s32.totalorder %v15, %v18
    %vm23 = vcmp.eq.s32.totalorder %v15, %v21
    %v24 = vsel %vm22, 1, 0
    %v25 = vsel %vm23, 1, 0
    %v26 = vcvt.s32.f32 %v24
    %v27 = vcvt.s32.f32 %v25
    %v28 = vadd.f32 %v26, 0.0
    %v29 = vadd.f32 %v27, 0.0
    %30 = vset.pattern.permute.xlu0 1
    %31 = vperm.xlu0 %30, %v12
    %v32 = vpop.permute.xlu0 %31
    %33 = vset.pattern.permute.xlu0 1
    %34 = vperm.xlu0 %33, %v13
    %v35 = vpop.permute.xlu0 %34
    %vm36 = vcmp.eq.s32.totalorder %v15, %v32
    %vm37 = vcmp.eq.s32.totalorder %v15, %v35
    %v38 = vsel %vm36, 1, 0
    %v39 = vsel %vm37, 1, 0
    %v40 = vcvt.s32.f32 %v38
    %v41 = vcvt.s32.f32 %v39
    %v42 = vadd.f32 %v28, %v40
    %v43 = vadd.f32 %v29, %v41
    %44 = vset.pattern.permute.xlu0 2
    %45 = vperm.xlu0 %44, %v12
    %v46 = vpop.permute.xlu0 %45
    %47 = vset.pattern.permute.xlu0 2
    %48 = vperm.xlu0 %47, %v13
    %v49 = vpop.permute.xlu0 %48
    %vm50 = vcmp.eq.s32.totalorder %v15, %v46
    %vm51 = vcmp.eq.s32.totalorder %v15, %v49
    %v52 = vsel %vm50, 1, 0
    %v53 = vsel %vm51, 1, 0
    %v54 = vcvt.s32.f32 %v52
    %v55 = vcvt.s32.f32 %v53
    %v56 = vadd.f32 %v42, %v54
    %v57 = vadd.f32 %v43, %v55
    %v58 = vld [vmem:[%s1] sm:$0xff]
    %v59 = vld [vmem:[%s1 + $0x8] sm:$0xff]
    %v60 = vld [vmem:[%s1 + $0x10] sm:$0x7f]
    %vm61 = vcmask 187392
    %v63 = vsel %vm61, %v56, 0
    %v66 = vsel %vm61, %v57, 0
    %vm68 = vcmask 1046528
    %v70 = vsel %vm68, %v60, 0
    %72 = vmatprep.subr.mxu0 0.0
    %73 = vmatpush1.msra.mxu0 0.0
    %74 = vmatprep.subr.mxu0 0.0
    %75 = vmatpush1.msra.mxu0 0.0
    %76 = vmatprep.subr.mxu0 0.0
    %77 = vmatpush1.msra.mxu0 0.0
    %78 = vmatprep.subr.mxu0 0.0
    %79 = vmatpush1.msra.mxu0 0.0
    %80 = vmatprep.subr.mxu0 0.0
    %81 = vmatpush1.msra.mxu0 0.0
    %82 = vmatprep.subr.mxu0 0.0
    %83 = vmatpush1.msra.mxu0 0.0
    %84 = vmatprep.subr.mxu0 0.0
    %85 = vmatpush1.msra.mxu0 0.0
    %86 = vmatprep.subr.mxu0 0.0
    %87 = vmatpush1.msra.mxu0 0.0
    %88 = vmatprep.subr.mxu0 0.0
    %89 = vmatpush1.msra.mxu0 0.0
    %90 = vmatprep.subr.mxu0 0.0
    %91 = vmatpush1.msra.mxu0 0.0
    %92 = vmatprep.subr.mxu0 0.0
    %93 = vmatpush1.msra.mxu0 0.0
    %94 = vmatprep.subr.mxu0 0.0
    %95 = vmatpush1.msra.mxu0 0.0
    %96 = vmatprep.subr.mxu0 0.0
    %97 = vmatpush1.msra.mxu0 0.0
    %98 = vmatprep.subr.mxu0 0.0
    %99 = vmatpush1.msra.mxu0 %v70
    %100 = vmatprep.subr.mxu0 0.0
    %101 = vmatpush1.msra.mxu0 %v59
    %102 = vmatprep.subr.mxu0 0.0
    %103 = vmatpush1.msra.mxu0 %v58
    %104 = vmatprep.subr.mxu0 0.0
    %105 = vmatpush2.msra.mxu0 0.0
    %106 = vmatprep.subr.mxu0 0.0
    %107 = vmatpush2.msra.mxu0 0.0
    %108 = vmatprep.subr.mxu0 0.0
    %109 = vmatpush2.msra.mxu0 0.0
    %110 = vmatprep.subr.mxu0 0.0
    %111 = vmatpush2.msra.mxu0 0.0
    %112 = vmatprep.subr.mxu0 0.0
    %113 = vmatpush2.msra.mxu0 0.0
    %114 = vmatprep.subr.mxu0 0.0
    %115 = vmatpush2.msra.mxu0 0.0
    %116 = vmatprep.subr.mxu0 0.0
    %117 = vmatpush2.msra.mxu0 0.0
    %118 = vmatprep.subr.mxu0 0.0
    %119 = vmatpush2.msra.mxu0 0.0
    %120 = vmatprep.subr.mxu0 0.0
    %121 = vmatpush2.msra.mxu0 0.0
    %122 = vmatprep.subr.mxu0 0.0
    %123 = vmatpush2.msra.mxu0 0.0
    %124 = vmatprep.subr.mxu0 0.0
    %125 = vmatpush2.msra.mxu0 0.0
    %126 = vmatprep.subr.mxu0 0.0
    %127 = vmatpush2.msra.mxu0 0.0
    %128 = vmatprep.subr.mxu0 0.0
    %129 = vmatpush2.msra.mxu0 0.0
    %130 = vmatprep.subr.mxu0 0.0
    %131 = vmatpush2.msra.mxu0 0.0
    %132 = vmatprep.subr.mxu0 0.0
    %133 = vmatpush2.msra.mxu0 0.0
    %134 = vmatprep.subr.mxu0 0.0
    %135 = vmatpush2.msra.mxu0 0.0
    %136 = vmatprep.mubr.f32.mxu0 0.0
    %137 = vmatmul.mubr.f32.gmra.mxu0 %v63
    %v138 = vpop.f32.mrf.mxu0
    %v139 = vadd.f32 0.0, %v138
    %v140 = vpop.f32.mrf.mxu0
    %141 = vmatprep.mubr.f32.mxu0 0.0
    %142 = vmatmul.mubr.f32.gmra.mxu0 %v66
    %v143 = vpop.f32.mrf.mxu0
    %v144 = vadd.f32 0.0, %v143
    %v145 = vpop.f32.mrf.mxu0
    %146 = vdwg.mxu0
    %vm147 = vcmask 261120
    %148 = vst.msk [vmem:[#allocation2] sm:$0xff] %vm147, %v139
    %149 = vst.msk [vmem:[#allocation2 + $0x8] sm:$0xff] %vm147, %v144
    // Predicated region
    $region10: #{fixed_feat_embedding_fwd.1} parent=1 // pred_check
      _
    $region11: #{fixed_feat_embedding_fwd.1} parent=1 // pred_check_branch
      %151 = sbr.rel (0) target = $region13
    $region12: #{fixed_feat_embedding_fwd.1} parent=1 // pred_region
      %s153 = ssub.s32 256, 256
      %154 = vsyncadd [#allocation3], %s153
      %s155 = sshll.u32 [#allocation2], 4
      %s156 = int_to_ptr.vmem [resolvable:$true] %s155
      %161 = dma.vmem_to_hbm [thread:$0]  %s156, 256, %s2, [#allocation3], 128, 128, 8
    $region13: #{fixed_feat_embedding_fwd.1} parent=1 // pred_fallthru
      _
    // Predicated region
    $region14: #{fixed_feat_embedding_fwd.1} parent=1 // pred_check
      _
    $region15: #{fixed_feat_embedding_fwd.1} parent=1 // pred_check_branch
      %163 = sbr.rel (0) target = $region17
    $region16: #{fixed_feat_embedding_fwd.1} parent=1 // pred_region
      %164 = dma.done [#allocation3], 256
    $region17: #{fixed_feat_embedding_fwd.1} parent=1 // pred_fallthru
      _
    %165 = vsyncpa [#allocation3], 1

</llo_original>
